<compile_context>
chip_gen: v7x
topology: tpu7x:2x2x1
jax: 0.10.0
libtpu: 0.0.40
codegen_flags: <defaults>
</compile_context>

<pallas_src>
import functools
import math

import jax
import jax.numpy as jnp
from jax.experimental import pallas as pl
from jax.experimental.pallas import tpu as pltpu


def adapter_kernel(x_ref, w1_ref, b1_ref, w2_ref, b2_ref, o_ref):
    """One row-tile: relu(x @ W1 + b1) @ W2 + b2 + x, with f32 accumulation."""
    x = x_ref[...]                                                    # (TM, D)
    # Down-projection d -> m on the MXU, f32 accumulation.
    h = jnp.dot(x, w1_ref[...], preferred_element_type=jnp.float32)  # (TM, M)
    h = jnp.maximum(h + b1_ref[...].astype(jnp.float32), 0.0)        # bias + ReLU
    # Up-projection m -> d. Keep h in f32: K = M is tiny, so a bf16 downcast
    # would only add VPU pack work and lose precision in the bottleneck.
    y = jnp.dot(h, w2_ref[...].astype(jnp.float32),
                preferred_element_type=jnp.float32)                  # (TM, D)
    y = y + b2_ref[...].astype(jnp.float32) + x.astype(jnp.float32)  # bias + residual
    o_ref[...] = y.astype(o_ref.dtype)                               # single final cast


def _round_up(a: int, b: int) -> int:
    return ((a + b - 1) // b) * b


@functools.partial(jax.jit, static_argnames=("row_tile",))
def adapter_forward(x, w1, b1, w2, b2, *, row_tile=512):
    """x: [..., D]; w1: [D, M]; b1: [M]; w2: [M, D]; b2: [D]."""
    D = x.shape[-1]
    M = w1.shape[1]
    rows = math.prod(x.shape[:-1])

    # Effective tile: sublane-aligned (multiple of 8), no larger than the
    # padded row count. Rows are padded so any batch*seq divides the tile;
    # padded rows are sliced off after the call.
    tile = min(_round_up(row_tile, 8), _round_up(rows, 8))
    rows_pad = _round_up(rows, tile)

    x2d = x.reshape(rows, D)
    if rows_pad != rows:
        x2d = jnp.pad(x2d, ((0, rows_pad - rows), (0, 0)))
    b1_2d = b1.reshape(1, M)
    b2_2d = b2.reshape(1, D)

    io_itemsize = jnp.dtype(x.dtype).itemsize
    w_itemsize = jnp.dtype(w1.dtype).itemsize

    # VMEM budget: double-buffered x/out tiles + resident params + f32
    # intermediates; 2x headroom, clamped to [32 MiB, 64 MiB] so the same
    # setting is valid on v5e/v6e (128 MiB physical) and v7x (64 MiB).
    tile_bytes = tile * D * io_itemsize
    param_bytes = (D * M + M * D + M + D) * w_itemsize
    needed = 2 * (2 * tile_bytes) + 2 * param_bytes + tile * (M + D) * 4
    vmem_limit = int(min(64 << 20, max(32 << 20, 2 * needed)))

    cost = pl.CostEstimate(
        flops=4 * rows_pad * D * M + rows_pad * (3 * D + 2 * M),
        transcendentals=0,
        bytes_accessed=2 * rows_pad * D * io_itemsize + param_bytes,
    )

    out2d = pl.pallas_call(
        adapter_kernel,
        out_shape=jax.ShapeDtypeStruct((rows_pad, D), x.dtype),
        grid_spec=pltpu.PrefetchScalarGridSpec(
            num_scalar_prefetch=0,
            grid=(rows_pad // tile,),
            in_specs=[
                pl.BlockSpec((tile, D), lambda i: (i, 0)),   # x row-tile
                pl.BlockSpec((D, M), lambda i: (0, 0)),      # W1 (resident)
                pl.BlockSpec((1, M), lambda i: (0, 0)),      # b1 (resident)
                pl.BlockSpec((M, D), lambda i: (0, 0)),      # W2 (resident)
                pl.BlockSpec((1, D), lambda i: (0, 0)),      # b2 (resident)
            ],
            out_specs=pl.BlockSpec((tile, D), lambda i: (i, 0)),
        ),
        compiler_params=pltpu.CompilerParams(
            # Row tiles are independent -> shard across TensorCores on v7x.
            dimension_semantics=("parallel",),
            vmem_limit_bytes=vmem_limit,
        ),
        cost_estimate=cost,
    )(x2d, w1, b1_2d, w2, b2_2d)

    if rows_pad != rows:
        out2d = out2d[:rows]
    return out2d.reshape(x.shape)


if __name__ == "__main__":
    # Small shapes consistent with the module: bottleneck size=32 (the module
    # default), model_dim=256 (a small, lane-aligned stand-in for 768).
    B, S, D, M = 2, 8, 256, 32

    key = jax.random.PRNGKey(0)
    kx, kw1, kb1, kw2, kb2 = jax.random.split(key, 5)

    x = jax.random.normal(kx, (B, S, D), dtype=jnp.float32)

    # Deterministic PyTorch nn.Linear-style uniform init.
    bound1 = 1.0 / math.sqrt(D)
    w1 = jax.random.uniform(kw1, (D, M), jnp.float32, -bound1, bound1)
    b1 = jax.random.uniform(kb1, (M,), jnp.float32, -bound1, bound1)
    bound2 = 1.0 / math.sqrt(M)
    w2 = jax.random.uniform(kw2, (M, D), jnp.float32, -bound2, bound2)
    b2 = jax.random.uniform(kb2, (D,), jnp.float32, -bound2, bound2)

    out = adapter_forward(x, w1, b1, w2, b2)
    jax.block_until_ready(out)

    # Pure-JAX reference (high-precision matmuls so the comparison is fair).
    hp = jax.lax.Precision.HIGHEST
    h_ref = jnp.maximum(jnp.dot(x, w1, precision=hp) + b1, 0.0)
    ref = jnp.dot(h_ref, w2, precision=hp) + b2 + x

    assert out.shape == (B, S, D)
    assert jnp.allclose(out, ref, atol=1e-4, rtol=1e-4), "mismatch vs reference"

    print("KERNEL_OK")
</pallas_src>

<mosaic_0001>
module attributes {stable_mosaic.version = 11 : i64} {
  func.func @adapter_kernel(%arg0: i32, %arg1: memref<16x256xf32, #tpu.memory_space<vmem>>, %arg2: memref<256x32xf32, #tpu.memory_space<vmem>>, %arg3: memref<1x32xf32, #tpu.memory_space<vmem>>, %arg4: memref<32x256xf32, #tpu.memory_space<vmem>>, %arg5: memref<1x256xf32, #tpu.memory_space<vmem>>, %arg6: memref<16x256xf32, #tpu.memory_space<vmem>>) attributes {dimension_semantics = [#tpu.dimension_semantics<parallel>], iteration_bounds = array<i64: 1>, scalar_prefetch = 0 : i64, scratch_operands = 0 : i64, tpu.core_type = #tpu.core_type<tc>, window_params = [{transform_indices = @transform_0, window_bounds = array<i64: 16, 256>}, {pipeline_mode = #tpu.pipeline_mode<synchronous>, transform_indices = @transform_1, window_bounds = array<i64: 256, 32>}, {pipeline_mode = #tpu.pipeline_mode<synchronous>, transform_indices = @transform_2, window_bounds = array<i64: 1, 32>}, {pipeline_mode = #tpu.pipeline_mode<synchronous>, transform_indices = @transform_3, window_bounds = array<i64: 32, 256>}, {pipeline_mode = #tpu.pipeline_mode<synchronous>, transform_indices = @transform_4, window_bounds = array<i64: 1, 256>}, {transform_indices = @transform_5, window_bounds = array<i64: 16, 256>}]} {
    %c0 = arith.constant 0 : index
    %c0_0 = arith.constant 0 : index
    %0 = vector.load %arg1[%c0, %c0_0] : memref<16x256xf32, #tpu.memory_space<vmem>>, vector<16x256xf32>
    %c0_1 = arith.constant 0 : index
    %c0_2 = arith.constant 0 : index
    %1 = vector.load %arg2[%c0_1, %c0_2] : memref<256x32xf32, #tpu.memory_space<vmem>>, vector<256x32xf32>
    %cst = arith.constant dense<0.000000e+00> : vector<16x32xf32>
    %2 = tpu.matmul %0, %1, %cst {dimension_numbers = #tpu.dot_dimension_numbers<[1], [0], [0], [1], [0, 0, 1, 1], [], []>} : vector<16x256xf32>, vector<256x32xf32>, vector<16x32xf32> -> vector<16x32xf32>
    %c0_3 = arith.constant 0 : index
    %c0_4 = arith.constant 0 : index
    %3 = vector.load %arg3[%c0_3, %c0_4] : memref<1x32xf32, #tpu.memory_space<vmem>>, vector<1x32xf32>
    %4 = vector.broadcast %3 : vector<1x32xf32> to vector<16x32xf32>
    %5 = arith.addf %2, %4 : vector<16x32xf32>
    %cst_5 = arith.constant 0.000000e+00 : f32
    %6 = vector.broadcast %cst_5 : f32 to vector<16x32xf32>
    %7 = arith.maximumf %5, %6 : vector<16x32xf32>
    %c0_6 = arith.constant 0 : index
    %c0_7 = arith.constant 0 : index
    %8 = vector.load %arg4[%c0_6, %c0_7] : memref<32x256xf32, #tpu.memory_space<vmem>>, vector<32x256xf32>
    %cst_8 = arith.constant dense<0.000000e+00> : vector<16x256xf32>
    %9 = tpu.matmul %7, %8, %cst_8 {dimension_numbers = #tpu.dot_dimension_numbers<[1], [0], [0], [1], [0, 0, 1, 1], [], []>} : vector<16x32xf32>, vector<32x256xf32>, vector<16x256xf32> -> vector<16x256xf32>
    %c0_9 = arith.constant 0 : index
    %c0_10 = arith.constant 0 : index
    %10 = vector.load %arg5[%c0_9, %c0_10] : memref<1x256xf32, #tpu.memory_space<vmem>>, vector<1x256xf32>
    %11 = vector.broadcast %10 : vector<1x256xf32> to vector<16x256xf32>
    %12 = arith.addf %9, %11 : vector<16x256xf32>
    %13 = arith.addf %12, %0 : vector<16x256xf32>
    %c0_11 = arith.constant 0 : index
    %c0_12 = arith.constant 0 : index
    %14 = vector.load %arg6[%c0_11, %c0_12] : memref<16x256xf32, #tpu.memory_space<vmem>>, vector<16x256xf32>
    tpu.vector_store %arg6[%c0_11, %c0_12], %13 {strides = array<i32>} : memref<16x256xf32, #tpu.memory_space<vmem>>, vector<16x256xf32>,
    return
  }
  func.func @transform_0(%arg0: i32) -> (i32, i32) {
    %c0_i32 = arith.constant 0 : i32
    %c0_i32_0 = arith.constant 0 : i32
    return %arg0, %c0_i32 : i32, i32
  }
  func.func @transform_1(%arg0: i32) -> (i32, i32) {
    %c0_i32 = arith.constant 0 : i32
    %c0_i32_0 = arith.constant 0 : i32
    %c0_i32_1 = arith.constant 0 : i32
    return %c0_i32, %c0_i32_0 : i32, i32
  }
  func.func @transform_2(%arg0: i32) -> (i32, i32) {
    %c0_i32 = arith.constant 0 : i32
    %c0_i32_0 = arith.constant 0 : i32
    %c0_i32_1 = arith.constant 0 : i32
    return %c0_i32, %c0_i32_0 : i32, i32
  }
  func.func @transform_3(%arg0: i32) -> (i32, i32) {
    %c0_i32 = arith.constant 0 : i32
    %c0_i32_0 = arith.constant 0 : i32
    %c0_i32_1 = arith.constant 0 : i32
    return %c0_i32, %c0_i32_0 : i32, i32
  }
  func.func @transform_4(%arg0: i32) -> (i32, i32) {
    %c0_i32 = arith.constant 0 : i32
    %c0_i32_0 = arith.constant 0 : i32
    %c0_i32_1 = arith.constant 0 : i32
    return %c0_i32, %c0_i32_0 : i32, i32
  }
  func.func @transform_5(%arg0: i32) -> (i32, i32) {
    %c0_i32 = arith.constant 0 : i32
    %c0_i32_0 = arith.constant 0 : i32
    return %arg0, %c0_i32 : i32, i32
  }
}

</mosaic_0001>

<llo_original>
// kernel: adapter_forward.1
$region0: #{adapter_forward.1}
  #allocation0 [shape = 'u32[]', space=smem, size = 0x4, offset = 0x4, fixed_abs, tag = 'smem constant byte address 0x4 - core index']
  #allocation1 [shape = 'u32[144,128]{1,0:T(1,128)}', space=vmem, size = 0x12000, scoped, tag = 'internal scratch']
  %s0 = inlined_call_operand.vmem [shape: f32[16,256], index: 0, kind: input, shape index: {}]
  %s1 = inlined_call_operand.vmem [shape: f32[256,32], index: 1, kind: input, shape index: {}]
  %s2 = inlined_call_operand.vmem [shape: f32[1,32], index: 2, kind: input, shape index: {}]
  %s3 = inlined_call_operand.vmem [shape: f32[32,256], index: 3, kind: input, shape index: {}]
  %s4 = inlined_call_operand.vmem [shape: f32[1,256], index: 4, kind: input, shape index: {}]
  %s5 = inlined_call_operand.hbm [shape: f32[16,256], index: 5, kind: output, shape index: {}]
  %s6 = sld [smem:[#allocation0]]
  $region30: #{adapter_forward.1} parent=0
    _
  %s8 = ssub.s32 1, %s6
  %s9 = scalar_select 0, %s8, %s6
  $region1: #{adapter_forward.1} parent=0
    #allocation2 [shape = 'u8[16384]{0}', space=vmem, size = 0x4000, scoped, tag = 'output window, operand 0, single buffered']
    #allocation3 [shape = 's32[1]{0}', space=sflag, size = 0x4, scoped, tag = 'scoped memory for adapter_forward.1']
    %10 = vsyncpa [#allocation3], 0
    // Predicated region
    $region2: #{adapter_forward.1} parent=1 // pred_check
      _
    $region3: #{adapter_forward.1} parent=1 // pred_check_branch
      %12 = sbr.rel (0) target = $region5
    $region4: #{adapter_forward.1} parent=1 // pred_region
      _
    $region5: #{adapter_forward.1} parent=1 // pred_fallthru
      _
    // Predicated region
    $region6: #{adapter_forward.1} parent=1 // pred_check
      _
    $region7: #{adapter_forward.1} parent=1 // pred_check_branch
      %14 = sbr.rel (0) target = $region9
    $region8: #{adapter_forward.1} parent=1 // pred_region
      _
    $region9: #{adapter_forward.1} parent=1 // pred_fallthru
      _
    // Predicated region
    $region10: #{adapter_forward.1} parent=1 // pred_check
      _
    $region11: #{adapter_forward.1} parent=1 // pred_check_branch
      %16 = sbr.rel (0) target = $region13
    $region12: #{adapter_forward.1} parent=1 // pred_region
      _
    $region13: #{adapter_forward.1} parent=1 // pred_fallthru
      _
    // Predicated region
    $region14: #{adapter_forward.1} parent=1 // pred_check
      _
    $region15: #{adapter_forward.1} parent=1 // pred_check_branch
      %18 = sbr.rel (0) target = $region17
    $region16: #{adapter_forward.1} parent=1 // pred_region
      _
    $region17: #{adapter_forward.1} parent=1 // pred_fallthru
      _
    // Predicated region
    $region18: #{adapter_forward.1} parent=1 // pred_check
      _
    $region19: #{adapter_forward.1} parent=1 // pred_check_branch
      %20 = sbr.rel (0) target = $region21
    $region20: #{adapter_forward.1} parent=1 // pred_region
      _
    $region21: #{adapter_forward.1} parent=1 // pred_fallthru
      _
    %v21 = vld [vmem:[%s0] sm:$0xff]
    %v22 = vld [vmem:[%s0 + $0x8] sm:$0xff]
    %v23 = vld [vmem:[%s0 + $0x10] sm:$0xff]
    %v24 = vld [vmem:[%s0 + $0x18] sm:$0xff]
    %v25 = vld [vmem:[%s1] sm:$0xff]
    %v26 = vld [vmem:[%s1 + $0x8] sm:$0xff]
    %v27 = vld [vmem:[%s1 + $0x10] sm:$0xff]
    %v28 = vld [vmem:[%s1 + $0x18] sm:$0xff]
    %v29 = vld [vmem:[%s1 + $0x20] sm:$0xff]
    %v30 = vld [vmem:[%s1 + $0x28] sm:$0xff]
    %v31 = vld [vmem:[%s1 + $0x30] sm:$0xff]
    %v32 = vld [vmem:[%s1 + $0x38] sm:$0xff]
    %v33 = vld [vmem:[%s1 + $0x40] sm:$0xff]
    %v34 = vld [vmem:[%s1 + $0x48] sm:$0xff]
    %v35 = vld [vmem:[%s1 + $0x50] sm:$0xff]
    %v36 = vld [vmem:[%s1 + $0x58] sm:$0xff]
    %v37 = vld [vmem:[%s1 + $0x60] sm:$0xff]
    %v38 = vld [vmem:[%s1 + $0x68] sm:$0xff]
    %v39 = vld [vmem:[%s1 + $0x70] sm:$0xff]
    %v40 = vld [vmem:[%s1 + $0x78] sm:$0xff]
    %v41 = vld [vmem:[%s1 + $0x80] sm:$0xff]
    %v42 = vld [vmem:[%s1 + $0x88] sm:$0xff]
    %v43 = vld [vmem:[%s1 + $0x90] sm:$0xff]
    %v44 = vld [vmem:[%s1 + $0x98] sm:$0xff]
    %v45 = vld [vmem:[%s1 + $0xa0] sm:$0xff]
    %v46 = vld [vmem:[%s1 + $0xa8] sm:$0xff]
    %v47 = vld [vmem:[%s1 + $0xb0] sm:$0xff]
    %v48 = vld [vmem:[%s1 + $0xb8] sm:$0xff]
    %v49 = vld [vmem:[%s1 + $0xc0] sm:$0xff]
    %v50 = vld [vmem:[%s1 + $0xc8] sm:$0xff]
    %v51 = vld [vmem:[%s1 + $0xd0] sm:$0xff]
    %v52 = vld [vmem:[%s1 + $0xd8] sm:$0xff]
    %v53 = vld [vmem:[%s1 + $0xe0] sm:$0xff]
    %v54 = vld [vmem:[%s1 + $0xe8] sm:$0xff]
    %v55 = vld [vmem:[%s1 + $0xf0] sm:$0xff]
    %v56 = vld [vmem:[%s1 + $0xf8] sm:$0xff]
    %v57 = vld [vmem:[%s2] sm:$0x1]
    %v59 = vlaneseq
    %v60 = vshrl.u32 %v59, 7
    %v61 = vsub.s32 0, %v60
    %v62 = vrot.slane %v57, %v61
    %64 = vmatprep.subr.mxu0 0.0
    %65 = vmatpush1.msra.mxu0 %v25
    %66 = vmatprep.subr.mxu0 0.0
    %67 = vmatpush1.msra.mxu0 %v26
    %68 = vmatprep.subr.mxu0 0.0
    %69 = vmatpush1.msra.mxu0 %v27
    %70 = vmatprep.subr.mxu0 0.0
    %71 = vmatpush1.msra.mxu0 %v28
    %72 = vmatprep.subr.mxu0 0.0
    %73 = vmatpush1.msra.mxu0 %v29
    %74 = vmatprep.subr.mxu0 0.0
    %75 = vmatpush1.msra.mxu0 %v30
    %76 = vmatprep.subr.mxu0 0.0
    %77 = vmatpush1.msra.mxu0 %v31
    %78 = vmatprep.subr.mxu0 0.0
    %79 = vmatpush1.msra.mxu0 %v32
    %80 = vmatprep.subr.mxu0 0.0
    %81 = vmatpush1.msra.mxu0 %v33
    %82 = vmatprep.subr.mxu0 0.0
    %83 = vmatpush1.msra.mxu0 %v34
    %84 = vmatprep.subr.mxu0 0.0
    %85 = vmatpush1.msra.mxu0 %v35
    %86 = vmatprep.subr.mxu0 0.0
    %87 = vmatpush1.msra.mxu0 %v36
    %88 = vmatprep.subr.mxu0 0.0
    %89 = vmatpush1.msra.mxu0 %v37
    %90 = vmatprep.subr.mxu0 0.0
    %91 = vmatpush1.msra.mxu0 %v38
    %92 = vmatprep.subr.mxu0 0.0
    %93 = vmatpush1.msra.mxu0 %v39
    %94 = vmatprep.subr.mxu0 0.0
    %95 = vmatpush1.msra.mxu0 %v40
    %96 = vmatprep.subr.mxu0 0.0
    %97 = vmatpush1.msra.mxu0 %v41
    %98 = vmatprep.subr.mxu0 0.0
    %99 = vmatpush1.msra.mxu0 %v42
    %100 = vmatprep.subr.mxu0 0.0
    %101 = vmatpush1.msra.mxu0 %v43
    %102 = vmatprep.subr.mxu0 0.0
    %103 = vmatpush1.msra.mxu0 %v44
    %104 = vmatprep.subr.mxu0 0.0
    %105 = vmatpush1.msra.mxu0 %v45
    %106 = vmatprep.subr.mxu0 0.0
    %107 = vmatpush1.msra.mxu0 %v46
    %108 = vmatprep.subr.mxu0 0.0
    %109 = vmatpush1.msra.mxu0 %v47
    %110 = vmatprep.subr.mxu0 0.0
    %111 = vmatpush1.msra.mxu0 %v48
    %112 = vmatprep.subr.mxu0 0.0
    %113 = vmatpush1.msra.mxu0 %v49
    %114 = vmatprep.subr.mxu0 0.0
    %115 = vmatpush1.msra.mxu0 %v50
    %116 = vmatprep.subr.mxu0 0.0
    %117 = vmatpush1.msra.mxu0 %v51
    %118 = vmatprep.subr.mxu0 0.0
    %119 = vmatpush1.msra.mxu0 %v52
    %120 = vmatprep.subr.mxu0 0.0
    %121 = vmatpush1.msra.mxu0 %v53
    %122 = vmatprep.subr.mxu0 0.0
    %123 = vmatpush1.msra.mxu0 %v54
    %124 = vmatprep.subr.mxu0 0.0
    %125 = vmatpush1.msra.mxu0 %v55
    %126 = vmatprep.subr.mxu0 0.0
    %127 = vmatpush1.msra.mxu0 %v56
    %128 = vmatprep.mubr.f32.mxu0 %v22
    %129 = vmatmul.mubr.f32.gmra.mrb[0].mxu0 %v21
    %v130 = vpop.f32.mrb[0].mxu0
    %v131 = vadd.f32 %v62, %v130
    %v132 = vpop.f32.mrb[0].mxu0
    %133 = vmatprep.mubr.f32.mxu0 %v24
    %134 = vmatmul.mubr.f32.gmra.mrb[0].mxu0 %v23
    %v135 = vpop.f32.mrb[0].mxu0
    %v136 = vadd.f32 %v62, %v135
    %v137 = vpop.f32.mrb[0].mxu0
    %138 = vdwg.mxu0
    %v139 = vmax.f32 %v131, 0.0
    %v140 = vmax.f32 %v136, 0.0
    %v141 = vld [vmem:[%s3] sm:$0xff]
    %v142 = vld [vmem:[%s3 + $0x8] sm:$0xff]
    %v143 = vld [vmem:[%s3 + $0x10] sm:$0xff]
    %v144 = vld [vmem:[%s3 + $0x18] sm:$0xff]
    %v145 = vld [vmem:[%s3 + $0x20] sm:$0xff]
    %v146 = vld [vmem:[%s3 + $0x28] sm:$0xff]
    %v147 = vld [vmem:[%s3 + $0x30] sm:$0xff]
    %v148 = vld [vmem:[%s3 + $0x38] sm:$0xff]
    %v149 = vld [vmem:[%s4] sm:$0x3]
    %v151 = vlaneseq
    %v152 = vshrl.u32 %v151, 7
    %v153 = vsub.s32 0, %v152
    %v154 = vrot.slane %v149, %v153
    %v155 = vlaneseq
    %v156 = vshrl.u32 %v155, 7
    %v157 = vsub.s32 1, %v156
    %v158 = vrot.slane %v149, %v157
    %vm161 = vcmask 261120
    %v163 = vsel %vm161, %v139, 0
    %v166 = vsel %vm161, %v140, 0
    %168 = vmatprep.subr.mxu0 %v142
    %169 = vmatpush1.msra.mxu0 %v141
    %170 = vmatprep.subr.mxu0 %v144
    %171 = vmatpush1.msra.mxu0 %v143
    %172 = vmatprep.subr.mxu0 %v146
    %173 = vmatpush1.msra.mxu0 %v145
    %174 = vmatprep.subr.mxu0 %v148
    %175 = vmatpush1.msra.mxu0 %v147
    %176 = vmatprep.subr.mxu0 0.0
    %177 = vmatpush1.msra.mxu0 0.0
    %178 = vmatprep.subr.mxu0 0.0
    %179 = vmatpush1.msra.mxu0 0.0
    %180 = vmatprep.subr.mxu0 0.0
    %181 = vmatpush1.msra.mxu0 0.0
    %182 = vmatprep.subr.mxu0 0.0
    %183 = vmatpush1.msra.mxu0 0.0
    %184 = vmatprep.subr.mxu0 0.0
    %185 = vmatpush1.msra.mxu0 0.0
    %186 = vmatprep.subr.mxu0 0.0
    %187 = vmatpush1.msra.mxu0 0.0
    %188 = vmatprep.subr.mxu0 0.0
    %189 = vmatpush1.msra.mxu0 0.0
    %190 = vmatprep.subr.mxu0 0.0
    %191 = vmatpush1.msra.mxu0 0.0
    %192 = vmatprep.subr.mxu0 0.0
    %193 = vmatpush1.msra.mxu0 0.0
    %194 = vmatprep.subr.mxu0 0.0
    %195 = vmatpush1.msra.mxu0 0.0
    %196 = vmatprep.subr.mxu0 0.0
    %197 = vmatpush1.msra.mxu0 0.0
    %198 = vmatprep.subr.mxu0 0.0
    %199 = vmatpush1.msra.mxu0 0.0
    %200 = vmatprep.subr.mxu0 0.0
    %201 = vmatpush1.msra.mxu0 0.0
    %202 = vmatprep.subr.mxu0 0.0
    %203 = vmatpush1.msra.mxu0 0.0
    %204 = vmatprep.subr.mxu0 0.0
    %205 = vmatpush1.msra.mxu0 0.0
    %206 = vmatprep.subr.mxu0 0.0
    %207 = vmatpush1.msra.mxu0 0.0
    %208 = vmatprep.subr.mxu0 0.0
    %209 = vmatpush1.msra.mxu0 0.0
    %210 = vmatprep.subr.mxu0 0.0
    %211 = vmatpush1.msra.mxu0 0.0
    %212 = vmatprep.subr.mxu0 0.0
    %213 = vmatpush1.msra.mxu0 0.0
    %214 = vmatprep.subr.mxu0 0.0
    %215 = vmatpush1.msra.mxu0 0.0
    %216 = vmatprep.subr.mxu0 0.0
    %217 = vmatpush1.msra.mxu0 0.0
    %218 = vmatprep.subr.mxu0 0.0
    %219 = vmatpush1.msra.mxu0 0.0
    %220 = vmatprep.subr.mxu0 0.0
    %221 = vmatpush1.msra.mxu0 0.0
    %222 = vmatprep.subr.mxu0 0.0
    %223 = vmatpush1.msra.mxu0 0.0
    %224 = vmatprep.subr.mxu0 0.0
    %225 = vmatpush1.msra.mxu0 0.0
    %226 = vmatprep.subr.mxu0 0.0
    %227 = vmatpush1.msra.mxu0 0.0
    %228 = vmatprep.subr.mxu0 0.0
    %229 = vmatpush1.msra.mxu0 0.0
    %230 = vmatprep.subr.mxu0 0.0
    %231 = vmatpush1.msra.mxu0 0.0
    %232 = vmatprep.mubr.f32.mxu0 0.0
    %233 = vmatmul.mubr.f32.gmra.mrb[0].mxu0 %v163
    %v234 = vpop.f32.mrb[0].mxu0
    %v235 = vadd.f32 %v154, %v234
    %v236 = vpop.f32.mrb[0].mxu0
    %v237 = vadd.f32 %v158, %v236
    %238 = vmatprep.mubr.f32.mxu0 0.0
    %239 = vmatmul.mubr.f32.gmra.mrb[0].mxu0 %v166
    %v240 = vpop.f32.mrb[0].mxu0
    %v241 = vadd.f32 %v154, %v240
    %v242 = vpop.f32.mrb[0].mxu0
    %v243 = vadd.f32 %v158, %v242
    %244 = vdwg.mxu0
    %v245 = vadd.f32 %v235, %v21
    %v246 = vadd.f32 %v237, %v22
    %v247 = vadd.f32 %v241, %v23
    %v248 = vadd.f32 %v243, %v24
    %249 = vst [vmem:[#allocation2] sm:$0xff] %v245
    %250 = vst [vmem:[#allocation2 + $0x8] sm:$0xff] %v246
    %251 = vst [vmem:[#allocation2 + $0x10] sm:$0xff] %v247
    %252 = vst [vmem:[#allocation2 + $0x18] sm:$0xff] %v248
    // Predicated region
    $region22: #{adapter_forward.1} parent=1 // pred_check
      _
    $region23: #{adapter_forward.1} parent=1 // pred_check_branch
      %254 = sbr.rel (0) target = $region25
    $region24: #{adapter_forward.1} parent=1 // pred_region
      %s256 = ssub.s32 512, 512
      %257 = vsyncadd [#allocation3], %s256
      %s258 = sshll.u32 [#allocation2], 4
      %s259 = int_to_ptr.vmem [resolvable:$true] %s258
      %264 = dma.vmem_to_hbm [thread:$0]  %s259, 512, %s5, [#allocation3], 256, 256, 16
    $region25: #{adapter_forward.1} parent=1 // pred_fallthru
      _
    // Predicated region
    $region26: #{adapter_forward.1} parent=1 // pred_check
      _
    $region27: #{adapter_forward.1} parent=1 // pred_check_branch
      %266 = sbr.rel (0) target = $region29
    $region28: #{adapter_forward.1} parent=1 // pred_region
      %267 = dma.done [#allocation3], 512
    $region29: #{adapter_forward.1} parent=1 // pred_fallthru
      _
    %268 = vsyncpa [#allocation3], 1

</llo_original>
